<compile_context>
chip_gen: v6e
topology: v6e:2x2x1
jax: 0.10.0
libtpu: 0.0.40
codegen_flags: <defaults>
</compile_context>

<pallas_src>
import functools
import random

import jax
import jax.numpy as jnp
import numpy as np
from jax import lax
from jax.experimental import pallas as pl
from jax.experimental.pallas import tpu as pltpu


_VMEM_LIMIT_BYTES = 32 * 1024 * 1024    # portable scoped-VMEM target (v5e/v6e/v7x)
_FUSED_LIMIT_BYTES = 2 * 1024 * 1024    # f32 bytes of x below which the fused path is used
_PARAM_HDR = 5                          # [apply_time, apply_freq, apply_noise, seed_a, seed_b]


def _round_up(x, m):
    return ((x + m - 1) // m) * m


# ----------------------------------------------------------------------------
# Portable in-kernel pseudo-random Gaussian noise.
#   counter -> lowbias32 hash (xor/shift/mul, pure VPU) -> 4 x 16-bit uniforms
#   -> Irwin-Hall sum, centered & scaled to unit variance.
# TODO(synk): this is an approximation to torch.randn (bounded tails), chosen
#   per the perf review to keep the noise path off the single EUP slot.
# ----------------------------------------------------------------------------
_HASH_M1 = np.int32(0x7FEB352D)
_HASH_M2 = np.int32(-2073319797)        # 0x846CA68B reinterpreted as int32
_HASH_C1 = np.int32(0x632BE5AB)


def _hash32(v):
    v = v ^ lax.shift_right_logical(v, np.int32(16))
    v = v * _HASH_M1
    v = v ^ lax.shift_right_logical(v, np.int32(15))
    v = v * _HASH_M2
    v = v ^ lax.shift_right_logical(v, np.int32(16))
    return v


def _gaussian_noise(shape, row_stride, col_offset, seed_a, seed_b):
    r = lax.broadcasted_iota(jnp.int32, shape, 0)
    c = lax.broadcasted_iota(jnp.int32, shape, 1)
    idx = r * np.int32(row_stride) + c + col_offset
    h1 = _hash32(idx + seed_a)
    h1 = _hash32(h1 ^ seed_b)
    h2 = _hash32(h1 + _HASH_C1)

    def u16(v, shift):
        return (lax.shift_right_logical(v, np.int32(shift))
                & np.int32(0xFFFF)).astype(jnp.float32)

    s = u16(h1, 0) + u16(h1, 16) + u16(h2, 0) + u16(h2, 16)
    return (s * np.float32(1.0 / 65536.0) - np.float32(2.0)) * np.float32(1.7320508075688772)


# ----------------------------------------------------------------------------
# Sequential `cloned.mean()` fill planning on thin (1,T)/(F,1) vectors.
# Reproduces the overlap-aware sequential PyTorch semantics exactly (a later
# mask sees the already-filled values).  Used both in-kernel (fused path) and
# in the wrapper (tiled path).
# ----------------------------------------------------------------------------
def _plan_time_masks(get, colsum, F_, T_, num_time_masks):
    N = jnp.float32(F_) * jnp.float32(T_)
    apply_time = get(0) != 0
    cur_col = colsum                                    # (1, T) current column sums
    cur_s = jnp.sum(cur_col)                            # current total sum
    tids = lax.broadcasted_iota(jnp.int32, (1, T_), 1)
    col_fill = jnp.zeros((1, T_), jnp.float32)
    col_mask = jnp.zeros((1, T_), jnp.bool_)
    for m in range(num_time_masks):
        s = get(_PARAM_HDR + 2 * m)
        e = get(_PARAM_HDR + 2 * m + 1)
        sel = apply_time & (tids >= s) & (tids < e)
        mean = cur_s / N
        ivl = jnp.sum(jnp.where(sel, cur_col, 0.0))
        width = jnp.sum(sel.astype(jnp.float32))
        cur_s = cur_s - ivl + jnp.float32(F_) * mean * width
        cur_col = jnp.where(sel, jnp.float32(F_) * mean, cur_col)
        col_fill = jnp.where(sel, mean, col_fill)
        col_mask = jnp.logical_or(col_mask, sel)
    return col_fill, col_mask, cur_col, cur_s


def _plan_freq_masks(get, cur_s, cur_col, col_mask, row_unmasked, F_, T_,
                     num_time_masks, num_freq_masks):
    N = jnp.float32(F_) * jnp.float32(T_)
    apply_freq = get(1) != 0
    # Row sums of the post-time-mask array: unmasked original part + fills.
    masked_fill_sum = jnp.sum(jnp.where(col_mask, cur_col, 0.0)) / jnp.float32(F_)
    cur_row = row_unmasked + masked_fill_sum            # (F, 1)
    fids = lax.broadcasted_iota(jnp.int32, (F_, 1), 0)
    row_fill = jnp.zeros((F_, 1), jnp.float32)
    row_mask = jnp.zeros((F_, 1), jnp.bool_)
    off = _PARAM_HDR + 2 * num_time_masks
    for m in range(num_freq_masks):
        s = get(off + 2 * m)
        e = get(off + 2 * m + 1)
        sel = apply_freq & (fids >= s) & (fids < e)
        mean = cur_s / N
        ivl = jnp.sum(jnp.where(sel, cur_row, 0.0))
        width = jnp.sum(sel.astype(jnp.float32))
        cur_s = cur_s - ivl + jnp.float32(T_) * mean * width
        cur_row = jnp.where(sel, jnp.float32(T_) * mean, cur_row)
        row_fill = jnp.where(sel, mean, row_fill)
        row_mask = jnp.logical_or(row_mask, sel)
    return row_fill, row_mask


# ----------------------------------------------------------------------------
# Fused single-pass kernel (whole spectrogram resident in VMEM).
# ----------------------------------------------------------------------------
def _fused_kernel(params_ref, x_ref, o_ref, *, F_, T_, num_time_masks,
                  num_freq_masks, noise_std, do_masks, do_noise):
    get = lambda k: params_ref[k]
    x = x_ref[...].astype(jnp.float32)                  # (F, T)
    y = x
    if do_masks:
        colsum = jnp.sum(x, axis=0, keepdims=True)      # (1, T)
        col_fill, col_mask, cur_col, cur_s = _plan_time_masks(
            get, colsum, F_, T_, num_time_masks)
        row_unmasked = jnp.sum(jnp.where(col_mask, 0.0, x), axis=1, keepdims=True)
        row_fill, row_mask = _plan_freq_masks(
            get, cur_s, cur_col, col_mask, row_unmasked, F_, T_,
            num_time_masks, num_freq_masks)
        y = jnp.where(col_mask, col_fill, y)            # time masks
        y = jnp.where(row_mask, row_fill, y)            # freq masks (applied later -> win)
    if do_noise:
        g = _gaussian_noise((F_, T_), T_, 0, params_ref[3], params_ref[4])
        y = y + jnp.float32(noise_std) * g
    o_ref[...] = y.astype(o_ref.dtype)


# ----------------------------------------------------------------------------
# Tiled fallback — phase 1: column sums + per-tile partial row sums over the
# columns not covered by any time mask.  Grid axis is fully parallel.
# ----------------------------------------------------------------------------
def _stats_kernel(params_ref, x_ref, colsum_ref, rowpart_ref, *, tile_t, T_,
                  num_time_masks):
    i = pl.program_id(0)
    x = x_ref[...].astype(jnp.float32)                  # (F, tile)
    colsum_ref[...] = jnp.sum(x, axis=0, keepdims=True)

    gcol = i * tile_t + lax.broadcasted_iota(jnp.int32, (1, tile_t), 1)
    valid = gcol < T_                                   # mask OOB lanes of the boundary tile
    apply_time = params_ref[0] != 0
    masked = jnp.zeros((1, tile_t), jnp.bool_)
    for m in range(num_time_masks):
        s = params_ref[_PARAM_HDR + 2 * m]
        e = params_ref[_PARAM_HDR + 2 * m + 1]
        masked = jnp.logical_or(masked, (gcol >= s) & (gcol < e))
    keep = valid & jnp.logical_not(masked & apply_time)
    rowpart_ref[0] = jnp.sum(jnp.where(keep, x, 0.0), axis=1, keepdims=True)


# ----------------------------------------------------------------------------
# Tiled fallback — phase 2: fused masked-fill + noise, one write pass.
# ----------------------------------------------------------------------------
def _apply_kernel(params_ref, x_ref, cfill_ref, cmask_ref, rfill_ref,
                  rmask_ref, o_ref, *, tile_t, T_, noise_std, do_noise):
    x = x_ref[...].astype(jnp.float32)                  # (F, tile)
    y = jnp.where(cmask_ref[...] > 0.5, cfill_ref[...], x)
    y = jnp.where(rmask_ref[...] > 0.5, rfill_ref[...], y)
    if do_noise:
        col0 = pl.program_id(0) * tile_t
        g = _gaussian_noise(x.shape, T_, col0, params_ref[3], params_ref[4])
        y = y + jnp.float32(noise_std) * g
    o_ref[...] = y.astype(o_ref.dtype)


# ----------------------------------------------------------------------------
# Wrappers.
# ----------------------------------------------------------------------------
def _specaug_fused(x, params, *, num_time_masks, num_freq_masks, noise_std,
                   do_masks, do_noise):
    F_, T_ = x.shape
    kernel = functools.partial(
        _fused_kernel, F_=F_, T_=T_, num_time_masks=num_time_masks,
        num_freq_masks=num_freq_masks, noise_std=noise_std,
        do_masks=do_masks, do_noise=do_noise)
    return pl.pallas_call(
        kernel,
        out_shape=jax.ShapeDtypeStruct((F_, T_), x.dtype),
        grid_spec=pltpu.PrefetchScalarGridSpec(
            num_scalar_prefetch=1,
            grid=(1,),
            in_specs=[pl.BlockSpec((F_, T_), lambda i, p: (0, 0))],
            out_specs=pl.BlockSpec((F_, T_), lambda i, p: (0, 0)),
        ),
        compiler_params=pltpu.CompilerParams(
            dimension_semantics=("arbitrary",),
            vmem_limit_bytes=_VMEM_LIMIT_BYTES),
    )(params, x)


def _specaug_tiled(x, params, *, num_time_masks, num_freq_masks, noise_std,
                   do_masks, do_noise, tile_t):
    F_, T_ = x.shape
    tile = max(128, min(_round_up(int(tile_t), 128), _round_up(T_, 128)))
    n_tiles = pl.cdiv(T_, tile)

    if do_masks:
        stats = functools.partial(_stats_kernel, tile_t=tile, T_=T_,
                                  num_time_masks=num_time_masks)
        colsum, rowparts = pl.pallas_call(
            stats,
            out_shape=(jax.ShapeDtypeStruct((1, T_), jnp.float32),
                       jax.ShapeDtypeStruct((n_tiles, F_, 1), jnp.float32)),
            grid_spec=pltpu.PrefetchScalarGridSpec(
                num_scalar_prefetch=1,
                grid=(n_tiles,),
                in_specs=[pl.BlockSpec((F_, tile), lambda i, p: (0, i))],
                out_specs=(pl.BlockSpec((1, tile), lambda i, p: (0, i)),
                           pl.BlockSpec((1, F_, 1), lambda i, p: (i, 0, 0))),
            ),
            compiler_params=pltpu.CompilerParams(
                dimension_semantics=("parallel",),      # no accumulator -> both v7x TCs
                vmem_limit_bytes=_VMEM_LIMIT_BYTES),
        )(params, x)
        get = lambda k: params[k]
        col_fill, col_mask, cur_col, cur_s = _plan_time_masks(
            get, colsum, F_, T_, num_time_masks)
        row_unmasked = jnp.sum(rowparts, axis=0)        # (F, 1)
        row_fill, row_mask = _plan_freq_masks(
            get, cur_s, cur_col, col_mask, row_unmasked, F_, T_,
            num_time_masks, num_freq_masks)
        col_mask = col_mask.astype(jnp.float32)
        row_mask = row_mask.astype(jnp.float32)
    else:
        col_fill = jnp.zeros((1, T_), jnp.float32)
        col_mask = jnp.zeros((1, T_), jnp.float32)
        row_fill = jnp.zeros((F_, 1), jnp.float32)
        row_mask = jnp.zeros((F_, 1), jnp.float32)

    apply = functools.partial(_apply_kernel, tile_t=tile, T_=T_,
                              noise_std=noise_std, do_noise=do_noise)
    return pl.pallas_call(
        apply,
        out_shape=jax.ShapeDtypeStruct((F_, T_), x.dtype),
        grid_spec=pltpu.PrefetchScalarGridSpec(
            num_scalar_prefetch=1,
            grid=(n_tiles,),
            in_specs=[
                pl.BlockSpec((F_, tile), lambda i, p: (0, i)),   # spectrogram
                pl.BlockSpec((1, tile), lambda i, p: (0, i)),    # col fill
                pl.BlockSpec((1, tile), lambda i, p: (0, i)),    # col mask
                pl.BlockSpec((F_, 1), lambda i, p: (0, 0)),      # row fill
                pl.BlockSpec((F_, 1), lambda i, p: (0, 0)),      # row mask
            ],
            out_specs=pl.BlockSpec((F_, tile), lambda i, p: (0, i)),
        ),
        compiler_params=pltpu.CompilerParams(
            dimension_semantics=("parallel",),
            vmem_limit_bytes=_VMEM_LIMIT_BYTES),
    )(params, x, col_fill, col_mask, row_fill, row_mask)


@functools.partial(jax.jit, static_argnames=(
    "num_time_masks", "num_freq_masks", "noise_std", "do_masks", "do_noise",
    "force_tiled", "tile_t"))
def specaug_pallas(spectrogram, params, *, num_time_masks, num_freq_masks,
                   noise_std, do_masks, do_noise, force_tiled=False,
                   tile_t=1024):
    F_, T_ = spectrogram.shape
    if not (do_masks or do_noise):
        return spectrogram
    kwargs = dict(num_time_masks=int(num_time_masks),
                  num_freq_masks=int(num_freq_masks),
                  noise_std=float(noise_std),
                  do_masks=bool(do_masks), do_noise=bool(do_noise))
    if (F_ * T_ * 4) <= _FUSED_LIMIT_BYTES and not force_tiled:
        return _specaug_fused(spectrogram, params, **kwargs)
    return _specaug_tiled(spectrogram, params, tile_t=tile_t, **kwargs)


# ----------------------------------------------------------------------------
# Host-side sampling of the random decisions (mirrors the PyTorch forward).
# ----------------------------------------------------------------------------
def sample_specaug_params(freq, time, *, T=None, num_time_masks=None,
                          p_time_mask=1.0, F=None, num_freq_masks=None,
                          p_freq_mask=1.0, noise_std=None, p_noise=None,
                          seed=0):
    rnd = random.Random(seed)
    apply_time = int(bool(T) and bool(num_time_masks) and rnd.random() < p_time_mask)
    apply_freq = int(bool(F) and bool(num_freq_masks) and rnd.random() < p_freq_mask)
    apply_noise = int(bool(noise_std) and bool(p_noise) and rnd.random() < p_noise)
    seed_a = rnd.randrange(0, 2 ** 31 - 1)
    seed_b = rnd.randrange(0, 2 ** 31 - 1)
    params = [apply_time, apply_freq, apply_noise, seed_a, seed_b]

    nt = int(num_time_masks or 0)
    nf = int(num_freq_masks or 0)

    t_masks = []
    if apply_time:
        for _ in range(nt):
            t = rnd.randrange(0, T)
            t = min(t, time - 1)          # guard: reference raises if t >= time
            t_zero = rnd.randrange(0, time - t)
            if t == 0:                    # module early-returns
                break
            mask_end = rnd.randrange(t_zero, t_zero + t)
            t_masks.append((t_zero, mask_end))
    while len(t_masks) < nt:
        t_masks.append((0, 0))
    for s, e in t_masks:
        params += [s, e]

    f_masks = []
    if apply_freq:
        for _ in range(nf):
            f = rnd.randrange(0, F)
            f = min(f, freq - 1)
            f_zero = rnd.randrange(0, freq - f)
            if f == 0:
                break
            mask_end = rnd.randrange(f_zero, f_zero + f)
            f_masks.append((f_zero, mask_end))
    while len(f_masks) < nf:
        f_masks.append((0, 0))
    for s, e in f_masks:
        params += [s, e]

    return np.asarray(params, dtype=np.int32)


def specaug(spectrogram, *, T=None, num_time_masks=None, p_time_mask=1.0,
            F=None, num_freq_masks=None, p_freq_mask=1.0,
            noise_std=None, p_noise=None, seed=0, tile_t=1024,
            force_tiled=False):
    """Convenience wrapper: host sampling + launch skip when nothing applies."""
    freq, time = spectrogram.shape
    params = sample_specaug_params(
        freq, time, T=T, num_time_masks=num_time_masks, p_time_mask=p_time_mask,
        F=F, num_freq_masks=num_freq_masks, p_freq_mask=p_freq_mask,
        noise_std=noise_std, p_noise=p_noise, seed=seed)
    do_masks = bool(params[0] or params[1])
    do_noise = bool(params[2])
    if not (do_masks or do_noise):
        return spectrogram                # nothing to do: skip the kernel launch
    return specaug_pallas(spectrogram, jnp.asarray(params),
                          num_time_masks=int(num_time_masks or 0),
                          num_freq_masks=int(num_freq_masks or 0),
                          noise_std=float(noise_std or 0.0),
                          do_masks=do_masks, do_noise=do_noise,
                          force_tiled=force_tiled, tile_t=tile_t)


# ----------------------------------------------------------------------------
# Pure-numpy reference (sequential semantics of the PyTorch module).
# ----------------------------------------------------------------------------
def specaug_ref(x, params, *, num_time_masks, num_freq_masks):
    x = np.array(x, dtype=np.float32).copy()
    apply_time, apply_freq = int(params[0]), int(params[1])
    off = _PARAM_HDR
    if apply_time:
        for i in range(num_time_masks):
            s, e = int(params[off + 2 * i]), int(params[off + 2 * i + 1])
            x[:, s:e] = x.mean()
    off += 2 * num_time_masks
    if apply_freq:
        for i in range(num_freq_masks):
            s, e = int(params[off + 2 * i]), int(params[off + 2 * i + 1])
            x[s:e, :] = x.mean()
    return x


# TODO(synk): the replace_with_zero=True branch of the PyTorch module indexes
# cloned[0][...] (channel 0 only) and presumes a 3-D input inconsistent with
# the rest of the code; only the default replace_with_zero=False path is
# implemented here.

if __name__ == "__main__":
    cfg = dict(T=20, num_time_masks=2, p_time_mask=1.0,
               F=6, num_freq_masks=2, p_freq_mask=1.0,
               noise_std=0.05, p_noise=1.0)

    FREQ, TIME = 80, 500          # time deliberately NOT a multiple of 128: no padding needed
    key = jax.random.PRNGKey(0)
    x = jax.random.normal(key, (FREQ, TIME), dtype=jnp.float32)

    # ---- Test 1: sampled masks, fused path, noise off -> exact match vs ref. ----
    params = sample_specaug_params(FREQ, TIME, seed=0, **cfg)
    out1 = specaug_pallas(x, jnp.asarray(params), num_time_masks=2, num_freq_masks=2,
                          noise_std=0.05, do_masks=True, do_noise=False)
    out1 = jax.block_until_ready(out1)
    ref1 = specaug_ref(np.asarray(x), params, num_time_masks=2, num_freq_masks=2)
    np.testing.assert_allclose(np.asarray(out1), ref1, rtol=1e-4, atol=1e-4)

    # ---- Test 2: hand-crafted OVERLAPPING masks (sequential-mean bookkeeping). ----
    pov = np.array([1, 1, 0, 12345, 67890,
                    40, 200, 150, 300,                       # overlapping time masks
                    8, 40, 24, 60], dtype=np.int32)          # overlapping freq masks
    ref2 = specaug_ref(np.asarray(x), pov, num_time_masks=2, num_freq_masks=2)
    out2 = specaug_pallas(x, jnp.asarray(pov), num_time_masks=2, num_freq_masks=2,
                          noise_std=0.0, do_masks=True, do_noise=False)
    np.testing.assert_allclose(np.asarray(jax.block_until_ready(out2)), ref2,
                               rtol=1e-4, atol=1e-4)

    # ---- Test 3: tiled fallback path (forced), partial boundary tile. ----
    out3 = specaug_pallas(x, jnp.asarray(pov), num_time_masks=2, num_freq_masks=2,
                          noise_std=0.0, do_masks=True, do_noise=False,
                          force_tiled=True, tile_t=128)
    np.testing.assert_allclose(np.asarray(jax.block_until_ready(out3)), ref2,
                               rtol=1e-4, atol=1e-4)

    # ---- Test 4: in-kernel hash noise (statistical check, fused + tiled). ----
    out4 = specaug_pallas(x, jnp.asarray(params), num_time_masks=2, num_freq_masks=2,
                          noise_std=0.05, do_masks=True, do_noise=True)
    delta = np.asarray(jax.block_until_ready(out4)) - np.asarray(out1)
    assert abs(float(delta.mean())) < 0.01, "noise mean off"
    assert 0.7 * 0.05 < float(delta.std()) < 1.3 * 0.05, "noise std off"

    out5 = specaug_pallas(x, jnp.asarray(params), num_time_masks=2, num_freq_masks=2,
                          noise_std=0.05, do_masks=False, do_noise=True,
                          force_tiled=True, tile_t=128)
    delta5 = np.asarray(jax.block_until_ready(out5)) - np.asarray(x)
    assert np.isfinite(delta5).all(), "tiled noise produced non-finite values"
    assert 0.7 * 0.05 < float(delta5.std()) < 1.3 * 0.05, "tiled noise std off"

    # ---- Test 5: native bf16 passthrough (no wrapper-side dtype casts). ----
    xb = x.astype(jnp.bfloat16)
    out6 = specaug_pallas(xb, jnp.asarray(pov), num_time_masks=2, num_freq_masks=2,
                          noise_std=0.0, do_masks=True, do_noise=False)
    out6 = jax.block_until_ready(out6)
    assert out6.dtype == jnp.bfloat16
    ref6 = specaug_ref(np.asarray(xb.astype(jnp.float32)), pov,
                       num_time_masks=2, num_freq_masks=2)
    np.testing.assert_allclose(np.asarray(out6).astype(np.float32), ref6,
                               rtol=5e-2, atol=5e-2)

    # ---- Convenience wrapper smoke tests (incl. host-side skip path). ----
    _ = jax.block_until_ready(specaug(x, seed=1, **cfg))
    _ = specaug(x, seed=3, T=20, num_time_masks=2, p_time_mask=0.0,
                F=6, num_freq_masks=2, p_freq_mask=0.0,
                noise_std=0.05, p_noise=0.0)

    print("KERNEL_OK")
</pallas_src>

<mosaic_0001>
module attributes {stable_mosaic.version = 11 : i64} {
  func.func @_fused_kernel(%arg0: i32, %arg1: memref<13xi32, #tpu.memory_space<smem>>, %arg2: memref<80x500xf32, #tpu.memory_space<vmem>>, %arg3: memref<80x500xf32, #tpu.memory_space<vmem>>) attributes {dimension_semantics = [#tpu.dimension_semantics<arbitrary>], iteration_bounds = array<i64: 1>, scalar_prefetch = 1 : i64, scratch_operands = 0 : i64, tpu.core_type = #tpu.core_type<tc>, window_params = [{pipeline_mode = #tpu.pipeline_mode<synchronous>, transform_indices = @transform_0, window_bounds = array<i64: 80, 500>}, {pipeline_mode = #tpu.pipeline_mode<synchronous>, transform_indices = @transform_1, window_bounds = array<i64: 80, 500>}]} {
    %c0 = arith.constant 0 : index
    %c0_0 = arith.constant 0 : index
    %0 = vector.load %arg2[%c0, %c0_0] : memref<80x500xf32, #tpu.memory_space<vmem>>, vector<80x500xf32>
    %cst = arith.constant dense<0.000000e+00> : vector<500xf32>
    %1 = vector.multi_reduction <add>, %0, %cst [0] : vector<80x500xf32> to vector<500xf32>
    %2 = vector.shape_cast %1 : vector<500xf32> to vector<1x500xf32>
    %cst_1 = arith.constant 8.000000e+01 : f32
    %cst_2 = arith.constant 5.000000e+02 : f32
    %3 = arith.mulf %cst_1, %cst_2 : f32
    %c0_3 = arith.constant 0 : index
    %4 = memref.load %arg1[%c0_3] : memref<13xi32, #tpu.memory_space<smem>>
    %c0_i32 = arith.constant 0 : i32
    %5 = arith.cmpi ne, %4, %c0_i32 : i32
    %6 = vector.shape_cast %2 : vector<1x500xf32> to vector<1x1x500xf32>
    %cst_4 = arith.constant dense<0.000000e+00> : vector<1xf32>
    %7 = vector.multi_reduction <add>, %6, %cst_4 [1, 2] : vector<1x1x500xf32> to vector<1xf32>
    %8 = vector.shape_cast %7 : vector<1xf32> to vector<1x1x1xf32>
    %9 = vector.extract %8[0, 0, 0] : f32 from vector<1x1x1xf32>
    %10 = tpu.iota {dimensions = array<i32: 1>} : vector<1x500xi32>
    %cst_5 = arith.constant 0.000000e+00 : f32
    %11 = vector.broadcast %cst_5 : f32 to vector<1x500xf32>
    %false = arith.constant false
    %12 = vector.broadcast %false : i1 to vector<1x500xi1>
    %c5 = arith.constant 5 : index
    %13 = memref.load %arg1[%c5] : memref<13xi32, #tpu.memory_space<smem>>
    %c6 = arith.constant 6 : index
    %14 = memref.load %arg1[%c6] : memref<13xi32, #tpu.memory_space<smem>>
    %15 = vector.broadcast %13 : i32 to vector<1x500xi32>
    %16 = arith.cmpi sge, %10, %15 : vector<1x500xi32>
    %17 = vector.broadcast %5 : i1 to vector<1x500xi1>
    %18 = arith.andi %17, %16 : vector<1x500xi1>
    %19 = vector.broadcast %14 : i32 to vector<1x500xi32>
    %20 = arith.cmpi slt, %10, %19 : vector<1x500xi32>
    %21 = arith.andi %18, %20 : vector<1x500xi1>
    %22 = arith.divf %9, %3 : f32
    %cst_6 = arith.constant 0.000000e+00 : f32
    %23 = vector.broadcast %cst_6 : f32 to vector<1x500xf32>
    %24 = arith.select %21, %2, %23 : vector<1x500xi1>, vector<1x500xf32>
    %25 = vector.shape_cast %24 : vector<1x500xf32> to vector<1x1x500xf32>
    %cst_7 = arith.constant dense<0.000000e+00> : vector<1xf32>
    %26 = vector.multi_reduction <add>, %25, %cst_7 [1, 2] : vector<1x1x500xf32> to vector<1xf32>
    %27 = vector.shape_cast %26 : vector<1xf32> to vector<1x1x1xf32>
    %28 = vector.extract %27[0, 0, 0] : f32 from vector<1x1x1xf32>
    %29 = arith.extui %21 : vector<1x500xi1> to vector<1x500xi32>
    %30 = arith.sitofp %29 : vector<1x500xi32> to vector<1x500xf32>
    %31 = vector.shape_cast %30 : vector<1x500xf32> to vector<1x1x500xf32>
    %cst_8 = arith.constant dense<0.000000e+00> : vector<1xf32>
    %32 = vector.multi_reduction <add>, %31, %cst_8 [1, 2] : vector<1x1x500xf32> to vector<1xf32>
    %33 = vector.shape_cast %32 : vector<1xf32> to vector<1x1x1xf32>
    %34 = vector.extract %33[0, 0, 0] : f32 from vector<1x1x1xf32>
    %35 = arith.subf %9, %28 : f32
    %cst_9 = arith.constant 8.000000e+01 : f32
    %36 = arith.mulf %cst_9, %22 : f32
    %37 = arith.mulf %36, %34 : f32
    %38 = arith.addf %35, %37 : f32
    %cst_10 = arith.constant 8.000000e+01 : f32
    %39 = arith.mulf %cst_10, %22 : f32
    %40 = vector.broadcast %39 : f32 to vector<1x500xf32>
    %41 = arith.select %21, %40, %2 : vector<1x500xi1>, vector<1x500xf32>
    %42 = vector.broadcast %22 : f32 to vector<1x500xf32>
    %43 = arith.select %21, %42, %11 : vector<1x500xi1>, vector<1x500xf32>
    %44 = arith.ori %12, %21 : vector<1x500xi1>
    %c7 = arith.constant 7 : index
    %45 = memref.load %arg1[%c7] : memref<13xi32, #tpu.memory_space<smem>>
    %c8 = arith.constant 8 : index
    %46 = memref.load %arg1[%c8] : memref<13xi32, #tpu.memory_space<smem>>
    %47 = vector.broadcast %45 : i32 to vector<1x500xi32>
    %48 = arith.cmpi sge, %10, %47 : vector<1x500xi32>
    %49 = vector.broadcast %5 : i1 to vector<1x500xi1>
    %50 = arith.andi %49, %48 : vector<1x500xi1>
    %51 = vector.broadcast %46 : i32 to vector<1x500xi32>
    %52 = arith.cmpi slt, %10, %51 : vector<1x500xi32>
    %53 = arith.andi %50, %52 : vector<1x500xi1>
    %54 = arith.divf %38, %3 : f32
    %cst_11 = arith.constant 0.000000e+00 : f32
    %55 = vector.broadcast %cst_11 : f32 to vector<1x500xf32>
    %56 = arith.select %53, %41, %55 : vector<1x500xi1>, vector<1x500xf32>
    %57 = vector.shape_cast %56 : vector<1x500xf32> to vector<1x1x500xf32>
    %cst_12 = arith.constant dense<0.000000e+00> : vector<1xf32>
    %58 = vector.multi_reduction <add>, %57, %cst_12 [1, 2] : vector<1x1x500xf32> to vector<1xf32>
    %59 = vector.shape_cast %58 : vector<1xf32> to vector<1x1x1xf32>
    %60 = vector.extract %59[0, 0, 0] : f32 from vector<1x1x1xf32>
    %61 = arith.extui %53 : vector<1x500xi1> to vector<1x500xi32>
    %62 = arith.sitofp %61 : vector<1x500xi32> to vector<1x500xf32>
    %63 = vector.shape_cast %62 : vector<1x500xf32> to vector<1x1x500xf32>
    %cst_13 = arith.constant dense<0.000000e+00> : vector<1xf32>
    %64 = vector.multi_reduction <add>, %63, %cst_13 [1, 2] : vector<1x1x500xf32> to vector<1xf32>
    %65 = vector.shape_cast %64 : vector<1xf32> to vector<1x1x1xf32>
    %66 = vector.extract %65[0, 0, 0] : f32 from vector<1x1x1xf32>
    %67 = arith.subf %38, %60 : f32
    %cst_14 = arith.constant 8.000000e+01 : f32
    %68 = arith.mulf %cst_14, %54 : f32
    %69 = arith.mulf %68, %66 : f32
    %70 = arith.addf %67, %69 : f32
    %cst_15 = arith.constant 8.000000e+01 : f32
    %71 = arith.mulf %cst_15, %54 : f32
    %72 = vector.broadcast %71 : f32 to vector<1x500xf32>
    %73 = arith.select %53, %72, %41 : vector<1x500xi1>, vector<1x500xf32>
    %74 = vector.broadcast %54 : f32 to vector<1x500xf32>
    %75 = arith.select %53, %74, %43 : vector<1x500xi1>, vector<1x500xf32>
    %76 = arith.ori %44, %53 : vector<1x500xi1>
    %cst_16 = arith.constant 0.000000e+00 : f32
    %77 = vector.shape_cast %76 : vector<1x500xi1> to vector<1x500xi1>
    %78 = vector.broadcast %77 : vector<1x500xi1> to vector<80x500xi1>
    %79 = vector.broadcast %cst_16 : f32 to vector<80x500xf32>
    %80 = arith.select %78, %79, %0 : vector<80x500xi1>, vector<80x500xf32>
    %cst_17 = arith.constant dense<0.000000e+00> : vector<80xf32>
    %81 = vector.multi_reduction <add>, %80, %cst_17 [1] : vector<80x500xf32> to vector<80xf32>
    %82 = vector.shape_cast %81 : vector<80xf32> to vector<80x1xf32>
    %cst_18 = arith.constant 8.000000e+01 : f32
    %cst_19 = arith.constant 5.000000e+02 : f32
    %83 = arith.mulf %cst_18, %cst_19 : f32
    %c1 = arith.constant 1 : index
    %84 = memref.load %arg1[%c1] : memref<13xi32, #tpu.memory_space<smem>>
    %c0_i32_20 = arith.constant 0 : i32
    %85 = arith.cmpi ne, %84, %c0_i32_20 : i32
    %cst_21 = arith.constant 0.000000e+00 : f32
    %86 = vector.broadcast %cst_21 : f32 to vector<1x500xf32>
    %87 = arith.select %76, %73, %86 : vector<1x500xi1>, vector<1x500xf32>
    %88 = vector.shape_cast %87 : vector<1x500xf32> to vector<1x1x500xf32>
    %cst_22 = arith.constant dense<0.000000e+00> : vector<1xf32>
    %89 = vector.multi_reduction <add>, %88, %cst_22 [1, 2] : vector<1x1x500xf32> to vector<1xf32>
    %90 = vector.shape_cast %89 : vector<1xf32> to vector<1x1x1xf32>
    %91 = vector.extract %90[0, 0, 0] : f32 from vector<1x1x1xf32>
    %cst_23 = arith.constant 8.000000e+01 : f32
    %92 = arith.divf %91, %cst_23 : f32
    %93 = vector.broadcast %92 : f32 to vector<80x1xf32>
    %94 = arith.addf %82, %93 : vector<80x1xf32>
    %95 = tpu.iota {dimensions = array<i32: 0>} : vector<80x1xi32>
    %cst_24 = arith.constant 0.000000e+00 : f32
    %96 = vector.broadcast %cst_24 : f32 to vector<80x1xf32>
    %false_25 = arith.constant false
    %97 = vector.broadcast %false_25 : i1 to vector<80x1xi1>
    %c9 = arith.constant 9 : index
    %98 = memref.load %arg1[%c9] : memref<13xi32, #tpu.memory_space<smem>>
    %c10 = arith.constant 10 : index
    %99 = memref.load %arg1[%c10] : memref<13xi32, #tpu.memory_space<smem>>
    %100 = vector.broadcast %98 : i32 to vector<80x1xi32>
    %101 = arith.cmpi sge, %95, %100 : vector<80x1xi32>
    %102 = vector.broadcast %85 : i1 to vector<80x1xi1>
    %103 = arith.andi %102, %101 : vector<80x1xi1>
    %104 = vector.broadcast %99 : i32 to vector<80x1xi32>
    %105 = arith.cmpi slt, %95, %104 : vector<80x1xi32>
    %106 = arith.andi %103, %105 : vector<80x1xi1>
    %107 = arith.divf %70, %83 : f32
    %cst_26 = arith.constant 0.000000e+00 : f32
    %108 = vector.broadcast %cst_26 : f32 to vector<80x1xf32>
    %109 = arith.select %106, %94, %108 : vector<80x1xi1>, vector<80x1xf32>
    %110 = vector.shape_cast %109 : vector<80x1xf32> to vector<1x80x1xf32>
    %cst_27 = arith.constant dense<0.000000e+00> : vector<1xf32>
    %111 = vector.multi_reduction <add>, %110, %cst_27 [1, 2] : vector<1x80x1xf32> to vector<1xf32>
    %112 = vector.shape_cast %111 : vector<1xf32> to vector<1x1x1xf32>
    %113 = vector.extract %112[0, 0, 0] : f32 from vector<1x1x1xf32>
    %114 = arith.extui %106 : vector<80x1xi1> to vector<80x1xi32>
    %115 = arith.sitofp %114 : vector<80x1xi32> to vector<80x1xf32>
    %116 = vector.shape_cast %115 : vector<80x1xf32> to vector<1x80x1xf32>
    %cst_28 = arith.constant dense<0.000000e+00> : vector<1xf32>
    %117 = vector.multi_reduction <add>, %116, %cst_28 [1, 2] : vector<1x80x1xf32> to vector<1xf32>
    %118 = vector.shape_cast %117 : vector<1xf32> to vector<1x1x1xf32>
    %119 = vector.extract %118[0, 0, 0] : f32 from vector<1x1x1xf32>
    %120 = arith.subf %70, %113 : f32
    %cst_29 = arith.constant 5.000000e+02 : f32
    %121 = arith.mulf %cst_29, %107 : f32
    %122 = arith.mulf %121, %119 : f32
    %123 = arith.addf %120, %122 : f32
    %124 = vector.broadcast %107 : f32 to vector<80x1xf32>
    %125 = arith.select %106, %124, %96 : vector<80x1xi1>, vector<80x1xf32>
    %126 = arith.ori %97, %106 : vector<80x1xi1>
    %c11 = arith.constant 11 : index
    %127 = memref.load %arg1[%c11] : memref<13xi32, #tpu.memory_space<smem>>
    %c12 = arith.constant 12 : index
    %128 = memref.load %arg1[%c12] : memref<13xi32, #tpu.memory_space<smem>>
    %129 = vector.broadcast %127 : i32 to vector<80x1xi32>
    %130 = arith.cmpi sge, %95, %129 : vector<80x1xi32>
    %131 = vector.broadcast %85 : i1 to vector<80x1xi1>
    %132 = arith.andi %131, %130 : vector<80x1xi1>
    %133 = vector.broadcast %128 : i32 to vector<80x1xi32>
    %134 = arith.cmpi slt, %95, %133 : vector<80x1xi32>
    %135 = arith.andi %132, %134 : vector<80x1xi1>
    %136 = arith.divf %123, %83 : f32
    %137 = vector.broadcast %136 : f32 to vector<80x1xf32>
    %138 = arith.select %135, %137, %125 : vector<80x1xi1>, vector<80x1xf32>
    %139 = arith.ori %126, %135 : vector<80x1xi1>
    %140 = vector.shape_cast %76 : vector<1x500xi1> to vector<1x500xi1>
    %141 = vector.broadcast %140 : vector<1x500xi1> to vector<80x500xi1>
    %142 = vector.shape_cast %75 : vector<1x500xf32> to vector<1x500xf32>
    %143 = vector.broadcast %142 : vector<1x500xf32> to vector<80x500xf32>
    %144 = arith.select %141, %143, %0 : vector<80x500xi1>, vector<80x500xf32>
    %145 = vector.shape_cast %139 : vector<80x1xi1> to vector<80x1xi1>
    %146 = vector.broadcast %145 : vector<80x1xi1> to vector<80x500xi1>
    %147 = vector.shape_cast %138 : vector<80x1xf32> to vector<80x1xf32>
    %148 = vector.broadcast %147 : vector<80x1xf32> to vector<80x500xf32>
    %149 = arith.select %146, %148, %144 : vector<80x500xi1>, vector<80x500xf32>
    %c0_30 = arith.constant 0 : index
    %c0_31 = arith.constant 0 : index
    %150 = vector.load %arg3[%c0_30, %c0_31] : memref<80x500xf32, #tpu.memory_space<vmem>>, vector<80x500xf32>
    tpu.vector_store %arg3[%c0_30, %c0_31], %149 {strides = array<i32>} : memref<80x500xf32, #tpu.memory_space<vmem>>, vector<80x500xf32>,
    return
  }
  func.func @transform_0(%arg0: i32, %arg1: memref<13xi32, #tpu.memory_space<smem>>) -> (i32, i32) {
    %c0_i32 = arith.constant 0 : i32
    %c0_i32_0 = arith.constant 0 : i32
    %c0_i32_1 = arith.constant 0 : i32
    return %c0_i32, %c0_i32_0 : i32, i32
  }
  func.func @transform_1(%arg0: i32, %arg1: memref<13xi32, #tpu.memory_space<smem>>) -> (i32, i32) {
    %c0_i32 = arith.constant 0 : i32
    %c0_i32_0 = arith.constant 0 : i32
    %c0_i32_1 = arith.constant 0 : i32
    return %c0_i32, %c0_i32_0 : i32, i32
  }
}

</mosaic_0001>

<llo_original>
// kernel: specaug_pallas.1
$region0: #{specaug_pallas.1}
  #allocation0 [shape = 'u32[]', space=smem, size = 0x4, offset = 0x4, fixed_abs, tag = 'smem constant byte address 0x4 - core index']
  #allocation1 [shape = 'u32[144,128]{1,0:T(1,128)}', space=vmem, size = 0x12000, scoped, tag = 'internal scratch']
  #allocation2 [shape = 's32[1]{0}', space=sflag, size = 0x4, scoped, tag = 'scoped memory for specaug_pallas.1']
  #allocation3 [shape = 'u8[512]{0}', space=smem, size = 0x200, scoped, tag = 'prefetched SMEM operand 0']
  %s0 = inlined_call_operand.vmem [shape: s32[13], index: 0, kind: input, shape index: {}]
  %s1 = inlined_call_operand.hbm [shape: f32[80,500], index: 1, kind: input, shape index: {}]
  %s2 = inlined_call_operand.hbm [shape: f32[80,500], index: 2, kind: output, shape index: {}]
  %s3 = sld [smem:[#allocation0]]
  $region18: #{specaug_pallas.1} parent=0
    _
  %s5 = ssub.s32 1, %s3
  %s6 = scalar_select 0, %s5, %s3
  %s7 = sshll.u32 %s0, 4
  %s8 = int_to_ptr.vmem [resolvable:$true] %s7
  %10 = dma.vmem_to_smem %s8, 16, [#allocation3], [#allocation2]
  %11 = dma.done [#allocation2], 16
  %12 = sfence
  $region1: #{specaug_pallas.1} parent=0
    #allocation4 [shape = 'u8[163840]{0}', space=vmem, size = 0x28000, scoped, tag = 'input window, operand 1, single buffered']
    #allocation5 [shape = 's32[1]{0}', space=sflag, size = 0x4, scoped, tag = 'scoped memory for specaug_pallas.1']
    #allocation6 [shape = 's32[1]{0}', space=sflag, size = 0x4, scoped, tag = 'scoped memory for specaug_pallas.1']
    #allocation7 [shape = 'u8[163840]{0}', space=vmem, size = 0x28000, scoped, tag = 'output window, operand 0, single buffered']
    %13 = vsyncpa [#allocation5], 0
    %14 = vsyncpa [#allocation6], 0
    // Predicated region
    $region2: #{specaug_pallas.1} parent=1 // pred_check
      _
    $region3: #{specaug_pallas.1} parent=1 // pred_check_branch
      %16 = sbr.rel (0) target = $region5
    $region4: #{specaug_pallas.1} parent=1 // pred_region
      %s18 = ssub.s32 5120, 5120
      %19 = vsyncadd [#allocation5], %s18
      %s20 = sshll.u32 [#allocation4], 4
      %s21 = int_to_ptr.vmem [resolvable:$true] %s20
      %26 = dma.hbm_to_vmem [thread:$0]  %s1, 5120, %s21, [#allocation5], 512, 512, 32
    $region5: #{specaug_pallas.1} parent=1 // pred_fallthru
      _
    // Predicated region
    $region6: #{specaug_pallas.1} parent=1 // pred_check
      _
    $region7: #{specaug_pallas.1} parent=1 // pred_check_branch
      %28 = sbr.rel (0) target = $region9
    $region8: #{specaug_pallas.1} parent=1 // pred_region
      %29 = dma.done [#allocation5], 5120
    $region9: #{specaug_pallas.1} parent=1 // pred_fallthru
      _
    %v30 = vld [vmem:[#allocation4] sm:$0xff]
    %v31 = vld [vmem:[#allocation4 + $0x8] sm:$0xff]
    %v32 = vld [vmem:[#allocation4 + $0x10] sm:$0xff]
    %v33 = vld [vmem:[#allocation4 + $0x18] sm:$0xff]
    %v34 = vld [vmem:[#allocation4 + $0x20] sm:$0xff]
    %v35 = vld [vmem:[#allocation4 + $0x28] sm:$0xff]
    %v36 = vld [vmem:[#allocation4 + $0x30] sm:$0xff]
    %v37 = vld [vmem:[#allocation4 + $0x38] sm:$0xff]
    %v38 = vld [vmem:[#allocation4 + $0x40] sm:$0xff]
    %v39 = vld [vmem:[#allocation4 + $0x48] sm:$0xff]
    %v40 = vld [vmem:[#allocation4 + $0x50] sm:$0xff]
    %v41 = vld [vmem:[#allocation4 + $0x58] sm:$0xff]
    %v42 = vld [vmem:[#allocation4 + $0x60] sm:$0xff]
    %v43 = vld [vmem:[#allocation4 + $0x68] sm:$0xff]
    %v44 = vld [vmem:[#allocation4 + $0x70] sm:$0xff]
    %v45 = vld [vmem:[#allocation4 + $0x78] sm:$0xff]
    %v46 = vld [vmem:[#allocation4 + $0x80] sm:$0xff]
    %v47 = vld [vmem:[#allocation4 + $0x88] sm:$0xff]
    %v48 = vld [vmem:[#allocation4 + $0x90] sm:$0xff]
    %v49 = vld [vmem:[#allocation4 + $0x98] sm:$0xff]
    %v50 = vld [vmem:[#allocation4 + $0xa0] sm:$0xff]
    %v51 = vld [vmem:[#allocation4 + $0xa8] sm:$0xff]
    %v52 = vld [vmem:[#allocation4 + $0xb0] sm:$0xff]
    %v53 = vld [vmem:[#allocation4 + $0xb8] sm:$0xff]
    %v54 = vld [vmem:[#allocation4 + $0xc0] sm:$0xff]
    %v55 = vld [vmem:[#allocation4 + $0xc8] sm:$0xff]
    %v56 = vld [vmem:[#allocation4 + $0xd0] sm:$0xff]
    %v57 = vld [vmem:[#allocation4 + $0xd8] sm:$0xff]
    %v58 = vld [vmem:[#allocation4 + $0xe0] sm:$0xff]
    %v59 = vld [vmem:[#allocation4 + $0xe8] sm:$0xff]
    %v60 = vld [vmem:[#allocation4 + $0xf0] sm:$0xff]
    %v61 = vld [vmem:[#allocation4 + $0xf8] sm:$0xff]
    %v62 = vld [vmem:[#allocation4 + $0x100] sm:$0xff]
    %v63 = vld [vmem:[#allocation4 + $0x108] sm:$0xff]
    %v64 = vld [vmem:[#allocation4 + $0x110] sm:$0xff]
    %v65 = vld [vmem:[#allocation4 + $0x118] sm:$0xff]
    %v66 = vld [vmem:[#allocation4 + $0x120] sm:$0xff]
    %v67 = vld [vmem:[#allocation4 + $0x128] sm:$0xff]
    %v68 = vld [vmem:[#allocation4 + $0x130] sm:$0xff]
    %v69 = vld [vmem:[#allocation4 + $0x138] sm:$0xff]
    %v70 = vadd.f32 %v30, %v34
    %v71 = vadd.f32 %v70, %v38
    %v72 = vadd.f32 %v71, %v42
    %v73 = vadd.f32 %v72, %v46
    %v74 = vadd.f32 %v73, %v50
    %v75 = vadd.f32 %v74, %v54
    %v76 = vadd.f32 %v75, %v58
    %v77 = vadd.f32 %v76, %v62
    %v78 = vadd.f32 %v77, %v66
    %v79 = vrot.slane %v78, 4
    %v80 = vadd.f32 %v78, %v79
    %v81 = vrot.slane %v80, 2
    %v82 = vadd.f32 %v80, %v81
    %v83 = vrot.slane %v82, 1
    %v84 = vadd.f32 %v82, %v83
    %v85 = vadd.f32 %v31, %v35
    %v86 = vadd.f32 %v85, %v39
    %v87 = vadd.f32 %v86, %v43
    %v88 = vadd.f32 %v87, %v47
    %v89 = vadd.f32 %v88, %v51
    %v90 = vadd.f32 %v89, %v55
    %v91 = vadd.f32 %v90, %v59
    %v92 = vadd.f32 %v91, %v63
    %v93 = vadd.f32 %v92, %v67
    %v94 = vrot.slane %v93, 4
    %v95 = vadd.f32 %v93, %v94
    %v96 = vrot.slane %v95, 2
    %v97 = vadd.f32 %v95, %v96
    %v98 = vrot.slane %v97, 1
    %v99 = vadd.f32 %v97, %v98
    %v100 = vadd.f32 %v32, %v36
    %v101 = vadd.f32 %v100, %v40
    %v102 = vadd.f32 %v101, %v44
    %v103 = vadd.f32 %v102, %v48
    %v104 = vadd.f32 %v103, %v52
    %v105 = vadd.f32 %v104, %v56
    %v106 = vadd.f32 %v105, %v60
    %v107 = vadd.f32 %v106, %v64
    %v108 = vadd.f32 %v107, %v68
    %v109 = vrot.slane %v108, 4
    %v110 = vadd.f32 %v108, %v109
    %v111 = vrot.slane %v110, 2
    %v112 = vadd.f32 %v110, %v111
    %v113 = vrot.slane %v112, 1
    %v114 = vadd.f32 %v112, %v113
    %vm115 = vcmask 949248
    %v116 = vsel %vm115, %v33, 0.0
    %v117 = vsel %vm115, %v37, 0.0
    %v118 = vadd.f32 %v116, %v117
    %v119 = vsel %vm115, %v41, 0.0
    %v120 = vadd.f32 %v118, %v119
    %v121 = vsel %vm115, %v45, 0.0
    %v122 = vadd.f32 %v120, %v121
    %v123 = vsel %vm115, %v49, 0.0
    %v124 = vadd.f32 %v122, %v123
    %v125 = vsel %vm115, %v53, 0.0
    %v126 = vadd.f32 %v124, %v125
    %v127 = vsel %vm115, %v57, 0.0
    %v128 = vadd.f32 %v126, %v127
    %v129 = vsel %vm115, %v61, 0.0
    %v130 = vadd.f32 %v128, %v129
    %v131 = vsel %vm115, %v65, 0.0
    %v132 = vadd.f32 %v130, %v131
    %v133 = vsel %vm115, %v69, 0.0
    %v134 = vadd.f32 %v132, %v133
    %v135 = vrot.slane %v134, 4
    %v136 = vadd.f32 %v134, %v135
    %v137 = vrot.slane %v136, 2
    %v138 = vadd.f32 %v136, %v137
    %v139 = vrot.slane %v138, 1
    %v140 = vadd.f32 %v138, %v139
    %s141 = sld [smem:[#allocation3]]
    %p142 = scmp.ne.s32.totalorder %s141, 0
    %vm143 = vcmask 1040384
    %v144 = vsel %vm143, %v84, 0.0
    %v145 = vsel %vm143, %v99, 0.0
    %v146 = vadd.f32 %v144, %v145
    %v147 = vsel %vm143, %v114, 0.0
    %v148 = vadd.f32 %v146, %v147
    %vm149 = vcmask 942080
    %v150 = vsel %vm149, %v140, 0.0
    %v151 = vadd.f32 %v148, %v150
    %152 = vadd.xlane.f32.xlu0 %v151
    %v153 = vpop.xlane.xlu0 %152
    %v154 = vrot.slane %v153, 4
    %v155 = vadd.f32 %v153, %v154
    %v156 = vrot.slane %v155, 2
    %v157 = vadd.f32 %v155, %v156
    %v158 = vrot.slane %v157, 1
    %v159 = vadd.f32 %v157, %v158
    %s160 = vtos %v159
    %v161 = vlaneseq
    %v162 = vand.u32 %v161, 127
    %v163 = vadd.s32 %v162, 128
    %v164 = vadd.s32 %v162, 256
    %v165 = vadd.s32 %v162, 384
    %s166 = sld [smem:[#allocation3 + $0x5]]
    %s167 = sld [smem:[#allocation3 + $0x6]]
    %v168 = vstv %s166
    %vm169 = vcmp.ge.s32.totalorder %v162, %v168
    %vm170 = vcmp.ge.s32.totalorder %v163, %v168
    %vm171 = vcmp.ge.s32.totalorder %v164, %v168
    %vm172 = vcmp.ge.s32.totalorder %v165, %v168
    %s173 = scalar_select %p142, 1, 0
    %v174 = vstv %s173
    %vm175 = vcmp.eq.s32.totalorder %v174, 1
    %vm176 = vmand %vm175, %vm169
    %vm177 = vmand %vm175, %vm170
    %vm178 = vmand %vm175, %vm171
    %vm179 = vmand %vm175, %vm172
    %v180 = vstv %s167
    %vm181 = vcmp.lt.s32.totalorder %v162, %v180
    %vm182 = vcmp.lt.s32.totalorder %v163, %v180
    %vm183 = vcmp.lt.s32.totalorder %v164, %v180
    %vm184 = vcmp.lt.s32.totalorder %v165, %v180
    %vm185 = vmand %vm176, %vm181
    %vm186 = vmand %vm177, %vm182
    %vm187 = vmand %vm178, %vm183
    %vm188 = vmand %vm179, %vm184
    %v189 = vrcp.pop 40000.0
    %s190 = vtos %v189
    %s191 = smul.f32 %s160, %s190
    %v192 = vsel %vm185, %v84, 0.0
    %v193 = vsel %vm186, %v99, 0.0
    %v194 = vsel %vm187, %v114, 0.0
    %v195 = vsel %vm188, %v140, 0.0
    %v196 = vsel %vm143, %v192, 0.0
    %v197 = vsel %vm143, %v193, 0.0
    %v198 = vadd.f32 %v196, %v197
    %v199 = vsel %vm143, %v194, 0.0
    %v200 = vadd.f32 %v198, %v199
    %v201 = vsel %vm149, %v195, 0.0
    %v202 = vadd.f32 %v200, %v201
    %203 = vadd.xlane.f32.xlu0 %v202
    %v204 = vpop.xlane.xlu0 %203
    %v205 = vrot.slane %v204, 4
    %v206 = vadd.f32 %v204, %v205
    %v207 = vrot.slane %v206, 2
    %v208 = vadd.f32 %v206, %v207
    %v209 = vrot.slane %v208, 1
    %v210 = vadd.f32 %v208, %v209
    %s211 = vtos %v210
    %v212 = vsel %vm185, 1, 0
    %v213 = vsel %vm186, 1, 0
    %v214 = vsel %vm187, 1, 0
    %v215 = vsel %vm188, 1, 0
    %v216 = vcvt.s32.f32 %v212
    %v217 = vcvt.s32.f32 %v213
    %v218 = vcvt.s32.f32 %v214
    %v219 = vcvt.s32.f32 %v215
    %v220 = vsel %vm143, %v216, 0.0
    %v221 = vsel %vm143, %v217, 0.0
    %v222 = vadd.f32 %v220, %v221
    %v223 = vsel %vm143, %v218, 0.0
    %v224 = vadd.f32 %v222, %v223
    %v225 = vsel %vm149, %v219, 0.0
    %v226 = vadd.f32 %v224, %v225
    %227 = vadd.xlane.f32.xlu0 %v226
    %v228 = vpop.xlane.xlu0 %227
    %v229 = vrot.slane %v228, 4
    %v230 = vadd.f32 %v228, %v229
    %v231 = vrot.slane %v230, 2
    %v232 = vadd.f32 %v230, %v231
    %v233 = vrot.slane %v232, 1
    %v234 = vadd.f32 %v232, %v233
    %s235 = vtos %v234
    %s236 = ssub.f32 %s160, %s211
    %s237 = smul.f32 %s191, 80.0
    %s238 = smul.f32 %s237, %s235
    %s239 = sadd.f32 %s236, %s238
    %v240 = vstv %s237
    %v241 = vsel %vm185, %v240, %v84
    %v242 = vsel %vm186, %v240, %v99
    %v243 = vsel %vm187, %v240, %v114
    %v244 = vsel %vm188, %v240, %v140
    %v245 = vstv %s191
    %v246 = vsel %vm185, %v245, 0.0
    %v247 = vsel %vm186, %v245, 0.0
    %v248 = vsel %vm187, %v245, 0.0
    %v249 = vsel %vm188, %v245, 0.0
    %s250 = sld [smem:[#allocation3 + $0x7]]
    %s251 = sld [smem:[#allocation3 + $0x8]]
    %v252 = vstv %s250
    %vm253 = vcmp.ge.s32.totalorder %v162, %v252
    %vm254 = vcmp.ge.s32.totalorder %v163, %v252
    %vm255 = vcmp.ge.s32.totalorder %v164, %v252
    %vm256 = vcmp.ge.s32.totalorder %v165, %v252
    %vm257 = vmand %vm175, %vm253
    %vm258 = vmand %vm175, %vm254
    %vm259 = vmand %vm175, %vm255
    %vm260 = vmand %vm175, %vm256
    %v261 = vstv %s251
    %vm262 = vcmp.lt.s32.totalorder %v162, %v261
    %vm263 = vcmp.lt.s32.totalorder %v163, %v261
    %vm264 = vcmp.lt.s32.totalorder %v164, %v261
    %vm265 = vcmp.lt.s32.totalorder %v165, %v261
    %vm266 = vmand %vm257, %vm262
    %vm267 = vmand %vm258, %vm263
    %vm268 = vmand %vm259, %vm264
    %vm269 = vmand %vm260, %vm265
    %v270 = vrcp.pop 40000.0
    %s271 = vtos %v270
    %s272 = smul.f32 %s239, %s271
    %v273 = vsel %vm266, %v241, 0.0
    %v274 = vsel %vm267, %v242, 0.0
    %v275 = vsel %vm268, %v243, 0.0
    %v276 = vsel %vm269, %v244, 0.0
    %v277 = vsel %vm143, %v273, 0.0
    %v278 = vsel %vm143, %v274, 0.0
    %v279 = vadd.f32 %v277, %v278
    %v280 = vsel %vm143, %v275, 0.0
    %v281 = vadd.f32 %v279, %v280
    %v282 = vsel %vm149, %v276, 0.0
    %v283 = vadd.f32 %v281, %v282
    %284 = vadd.xlane.f32.xlu0 %v283
    %v285 = vpop.xlane.xlu0 %284
    %v286 = vrot.slane %v285, 4
    %v287 = vadd.f32 %v285, %v286
    %v288 = vrot.slane %v287, 2
    %v289 = vadd.f32 %v287, %v288
    %v290 = vrot.slane %v289, 1
    %v291 = vadd.f32 %v289, %v290
    %s292 = vtos %v291
    %v293 = vsel %vm266, 1, 0
    %v294 = vsel %vm267, 1, 0
    %v295 = vsel %vm268, 1, 0
    %v296 = vsel %vm269, 1, 0
    %v297 = vcvt.s32.f32 %v293
    %v298 = vcvt.s32.f32 %v294
    %v299 = vcvt.s32.f32 %v295
    %v300 = vcvt.s32.f32 %v296
    %v301 = vsel %vm143, %v297, 0.0
    %v302 = vsel %vm143, %v298, 0.0
    %v303 = vadd.f32 %v301, %v302
    %v304 = vsel %vm143, %v299, 0.0
    %v305 = vadd.f32 %v303, %v304
    %v306 = vsel %vm149, %v300, 0.0
    %v307 = vadd.f32 %v305, %v306
    %308 = vadd.xlane.f32.xlu0 %v307
    %v309 = vpop.xlane.xlu0 %308
    %v310 = vrot.slane %v309, 4
    %v311 = vadd.f32 %v309, %v310
    %v312 = vrot.slane %v311, 2
    %v313 = vadd.f32 %v311, %v312
    %v314 = vrot.slane %v313, 1
    %v315 = vadd.f32 %v313, %v314
    %s316 = vtos %v315
    %s317 = ssub.f32 %s239, %s292
    %s318 = smul.f32 %s272, 80.0
    %s319 = smul.f32 %s318, %s316
    %s320 = sadd.f32 %s317, %s319
    %v321 = vstv %s318
    %v322 = vsel %vm266, %v321, %v241
    %v323 = vsel %vm267, %v321, %v242
    %v324 = vsel %vm268, %v321, %v243
    %v325 = vsel %vm269, %v321, %v244
    %v326 = vstv %s272
    %v327 = vsel %vm266, %v326, %v246
    %v328 = vsel %vm267, %v326, %v247
    %v329 = vsel %vm268, %v326, %v248
    %v330 = vsel %vm269, %v326, %v249
    %vm331 = vmor %vm185, %vm266
    %vm332 = vmor %vm186, %vm267
    %vm333 = vmor %vm187, %vm268
    %vm334 = vmor %vm188, %vm269
    %v335 = vsel %vm331, 1, 0
    %v336 = vsel %vm332, 1, 0
    %v337 = vsel %vm333, 1, 0
    %v338 = vsel %vm334, 1, 0
    %vm339 = vcmp.eq.s32.totalorder %v335, 1
    %vm340 = vcmp.eq.s32.totalorder %v336, 1
    %vm341 = vcmp.eq.s32.totalorder %v337, 1
    %vm342 = vcmp.eq.s32.totalorder %v338, 1
    %v343 = vsel %vm339, 0.0, %v30
    %v344 = vsel %vm340, 0.0, %v31
    %v345 = vsel %vm341, 0.0, %v32
    %v346 = vsel %vm342, 0.0, %v33
    %v347 = vsel %vm339, 0.0, %v34
    %v348 = vsel %vm340, 0.0, %v35
    %v349 = vsel %vm341, 0.0, %v36
    %v350 = vsel %vm342, 0.0, %v37
    %v351 = vsel %vm339, 0.0, %v38
    %v352 = vsel %vm340, 0.0, %v39
    %v353 = vsel %vm341, 0.0, %v40
    %v354 = vsel %vm342, 0.0, %v41
    %v355 = vsel %vm339, 0.0, %v42
    %v356 = vsel %vm340, 0.0, %v43
    %v357 = vsel %vm341, 0.0, %v44
    %v358 = vsel %vm342, 0.0, %v45
    %v359 = vsel %vm339, 0.0, %v46
    %v360 = vsel %vm340, 0.0, %v47
    %v361 = vsel %vm341, 0.0, %v48
    %v362 = vsel %vm342, 0.0, %v49
    %v363 = vsel %vm339, 0.0, %v50
    %v364 = vsel %vm340, 0.0, %v51
    %v365 = vsel %vm341, 0.0, %v52
    %v366 = vsel %vm342, 0.0, %v53
    %v367 = vsel %vm339, 0.0, %v54
    %v368 = vsel %vm340, 0.0, %v55
    %v369 = vsel %vm341, 0.0, %v56
    %v370 = vsel %vm342, 0.0, %v57
    %v371 = vsel %vm339, 0.0, %v58
    %v372 = vsel %vm340, 0.0, %v59
    %v373 = vsel %vm341, 0.0, %v60
    %v374 = vsel %vm342, 0.0, %v61
    %v375 = vsel %vm339, 0.0, %v62
    %v376 = vsel %vm340, 0.0, %v63
    %v377 = vsel %vm341, 0.0, %v64
    %v378 = vsel %vm342, 0.0, %v65
    %v379 = vsel %vm339, 0.0, %v66
    %v380 = vsel %vm340, 0.0, %v67
    %v381 = vsel %vm341, 0.0, %v68
    %v382 = vsel %vm342, 0.0, %v69
    %v383 = vadd.f32 %v343, %v344
    %v384 = vadd.f32 %v383, %v345
    %v385 = vsel %vm115, %v346, 0.0
    %v386 = vadd.f32 %v384, %v385
    %387 = vadd.xlane.f32.xlu0 %v386
    %v388 = vpop.xlane.xlu0 %387
    %v389 = vadd.f32 %v347, %v348
    %v390 = vadd.f32 %v389, %v349
    %v391 = vsel %vm115, %v350, 0.0
    %v392 = vadd.f32 %v390, %v391
    %393 = vadd.xlane.f32.xlu0 %v392
    %v394 = vpop.xlane.xlu0 %393
    %v395 = vadd.f32 %v351, %v352
    %v396 = vadd.f32 %v395, %v353
    %v397 = vsel %vm115, %v354, 0.0
    %v398 = vadd.f32 %v396, %v397
    %399 = vadd.xlane.f32.xlu0 %v398
    %v400 = vpop.xlane.xlu0 %399
    %v401 = vadd.f32 %v355, %v356
    %v402 = vadd.f32 %v401, %v357
    %v403 = vsel %vm115, %v358, 0.0
    %v404 = vadd.f32 %v402, %v403
    %405 = vadd.xlane.f32.xlu0 %v404
    %v406 = vpop.xlane.xlu0 %405
    %v407 = vadd.f32 %v359, %v360
    %v408 = vadd.f32 %v407, %v361
    %v409 = vsel %vm115, %v362, 0.0
    %v410 = vadd.f32 %v408, %v409
    %411 = vadd.xlane.f32.xlu0 %v410
    %v412 = vpop.xlane.xlu0 %411
    %v413 = vadd.f32 %v363, %v364
    %v414 = vadd.f32 %v413, %v365
    %v415 = vsel %vm115, %v366, 0.0
    %v416 = vadd.f32 %v414, %v415
    %417 = vadd.xlane.f32.xlu0 %v416
    %v418 = vpop.xlane.xlu0 %417
    %v419 = vadd.f32 %v367, %v368
    %v420 = vadd.f32 %v419, %v369
    %v421 = vsel %vm115, %v370, 0.0
    %v422 = vadd.f32 %v420, %v421
    %423 = vadd.xlane.f32.xlu0 %v422
    %v424 = vpop.xlane.xlu0 %423
    %v425 = vadd.f32 %v371, %v372
    %v426 = vadd.f32 %v425, %v373
    %v427 = vsel %vm115, %v374, 0.0
    %v428 = vadd.f32 %v426, %v427
    %429 = vadd.xlane.f32.xlu0 %v428
    %v430 = vpop.xlane.xlu0 %429
    %v431 = vadd.f32 %v375, %v376
    %v432 = vadd.f32 %v431, %v377
    %v433 = vsel %vm115, %v378, 0.0
    %v434 = vadd.f32 %v432, %v433
    %435 = vadd.xlane.f32.xlu0 %v434
    %v436 = vpop.xlane.xlu0 %435
    %v437 = vadd.f32 %v379, %v380
    %v438 = vadd.f32 %v437, %v381
    %v439 = vsel %vm115, %v382, 0.0
    %v440 = vadd.f32 %v438, %v439
    %441 = vadd.xlane.f32.xlu0 %v440
    %v442 = vpop.xlane.xlu0 %441
    %s443 = sld [smem:[#allocation3 + $0x1]]
    %p444 = scmp.ne.s32.totalorder %s443, 0
    %v445 = vsel %vm331, %v322, 0.0
    %v446 = vsel %vm332, %v323, 0.0
    %v447 = vsel %vm333, %v324, 0.0
    %v448 = vsel %vm334, %v325, 0.0
    %v449 = vsel %vm143, %v445, 0.0
    %v450 = vsel %vm143, %v446, 0.0
    %v451 = vadd.f32 %v449, %v450
    %v452 = vsel %vm143, %v447, 0.0
    %v453 = vadd.f32 %v451, %v452
    %v454 = vsel %vm149, %v448, 0.0
    %v455 = vadd.f32 %v453, %v454
    %456 = vadd.xlane.f32.xlu0 %v455
    %v457 = vpop.xlane.xlu0 %456
    %v458 = vrot.slane %v457, 4
    %v459 = vadd.f32 %v457, %v458
    %v460 = vrot.slane %v459, 2
    %v461 = vadd.f32 %v459, %v460
    %v462 = vrot.slane %v461, 1
    %v463 = vadd.f32 %v461, %v462
    %s464 = vtos %v463
    %v465 = vrcp.pop 80.0
    %s466 = vtos %v465
    %s467 = smul.f32 %s464, %s466
    %v468 = vstv %s467
    %v469 = vadd.f32 %v388, %v468
    %v470 = vadd.f32 %v394, %v468
    %v471 = vadd.f32 %v400, %v468
    %v472 = vadd.f32 %v406, %v468
    %v473 = vadd.f32 %v412, %v468
    %v474 = vadd.f32 %v418, %v468
    %v475 = vadd.f32 %v424, %v468
    %v476 = vadd.f32 %v430, %v468
    %v477 = vadd.f32 %v436, %v468
    %v478 = vadd.f32 %v442, %v468
    %v479 = vlaneseq
    %v480 = vshrl.u32 %v479, 7
    %v481 = vadd.s32 %v480, 8
    %v482 = vadd.s32 %v480, 16
    %v483 = vadd.s32 %v480, 24
    %v484 = vadd.s32 %v480, 32
    %v485 = vadd.s32 %v480, 40
    %v486 = vadd.s32 %v480, 48
    %v487 = vadd.s32 %v480, 56
    %v488 = vadd.s32 %v480, 64
    %v489 = vadd.s32 %v480, 72
    %s490 = sld [smem:[#allocation3 + $0x9]]
    %s491 = sld [smem:[#allocation3 + $0xa]]
    %v492 = vstv %s490
    %vm493 = vcmp.ge.s32.totalorder %v480, %v492
    %vm494 = vcmp.ge.s32.totalorder %v481, %v492
    %vm495 = vcmp.ge.s32.totalorder %v482, %v492
    %vm496 = vcmp.ge.s32.totalorder %v483, %v492
    %vm497 = vcmp.ge.s32.totalorder %v484, %v492
    %vm498 = vcmp.ge.s32.totalorder %v485, %v492
    %vm499 = vcmp.ge.s32.totalorder %v486, %v492
    %vm500 = vcmp.ge.s32.totalorder %v487, %v492
    %vm501 = vcmp.ge.s32.totalorder %v488, %v492
    %vm502 = vcmp.ge.s32.totalorder %v489, %v492
    %s503 = scalar_select %p444, 1, 0
    %v504 = vstv %s503
    %vm505 = vcmp.eq.s32.totalorder %v504, 1
    %vm506 = vmand %vm505, %vm493
    %vm507 = vmand %vm505, %vm494
    %vm508 = vmand %vm505, %vm495
    %vm509 = vmand %vm505, %vm496
    %vm510 = vmand %vm505, %vm497
    %vm511 = vmand %vm505, %vm498
    %vm512 = vmand %vm505, %vm499
    %vm513 = vmand %vm505, %vm500
    %vm514 = vmand %vm505, %vm501
    %vm515 = vmand %vm505, %vm502
    %v516 = vstv %s491
    %vm517 = vcmp.lt.s32.totalorder %v480, %v516
    %vm518 = vcmp.lt.s32.totalorder %v481, %v516
    %vm519 = vcmp.lt.s32.totalorder %v482, %v516
    %vm520 = vcmp.lt.s32.totalorder %v483, %v516
    %vm521 = vcmp.lt.s32.totalorder %v484, %v516
    %vm522 = vcmp.lt.s32.totalorder %v485, %v516
    %vm523 = vcmp.lt.s32.totalorder %v486, %v516
    %vm524 = vcmp.lt.s32.totalorder %v487, %v516
    %vm525 = vcmp.lt.s32.totalorder %v488, %v516
    %vm526 = vcmp.lt.s32.totalorder %v489, %v516
    %vm527 = vmand %vm506, %vm517
    %vm528 = vmand %vm507, %vm518
    %vm529 = vmand %vm508, %vm519
    %vm530 = vmand %vm509, %vm520
    %vm531 = vmand %vm510, %vm521
    %vm532 = vmand %vm511, %vm522
    %vm533 = vmand %vm512, %vm523
    %vm534 = vmand %vm513, %vm524
    %vm535 = vmand %vm514, %vm525
    %vm536 = vmand %vm515, %vm526
    %v537 = vrcp.pop 40000.0
    %s538 = vtos %v537
    %s539 = smul.f32 %s320, %s538
    %v540 = vsel %vm527, %v469, 0.0
    %v541 = vsel %vm528, %v470, 0.0
    %v542 = vsel %vm529, %v471, 0.0
    %v543 = vsel %vm530, %v472, 0.0
    %v544 = vsel %vm531, %v473, 0.0
    %v545 = vsel %vm532, %v474, 0.0
    %v546 = vsel %vm533, %v475, 0.0
    %v547 = vsel %vm534, %v476, 0.0
    %v548 = vsel %vm535, %v477, 0.0
    %v549 = vsel %vm536, %v478, 0.0
    %vm550 = vcmask 7168
    %v551 = vsel %vm550, %v540, 0.0
    %v552 = vsel %vm550, %v541, 0.0
    %v553 = vadd.f32 %v551, %v552
    %v554 = vsel %vm550, %v542, 0.0
    %v555 = vadd.f32 %v553, %v554
    %v556 = vsel %vm550, %v543, 0.0
    %v557 = vadd.f32 %v555, %v556
    %v558 = vsel %vm550, %v544, 0.0
    %v559 = vadd.f32 %v557, %v558
    %v560 = vsel %vm550, %v545, 0.0
    %v561 = vadd.f32 %v559, %v560
    %v562 = vsel %vm550, %v546, 0.0
    %v563 = vadd.f32 %v561, %v562
    %v564 = vsel %vm550, %v547, 0.0
    %v565 = vadd.f32 %v563, %v564
    %v566 = vsel %vm550, %v548, 0.0
    %v567 = vadd.f32 %v565, %v566
    %v568 = vsel %vm550, %v549, 0.0
    %v569 = vadd.f32 %v567, %v568
    %570 = vadd.xlane.f32.xlu0 %v569
    %v571 = vpop.xlane.xlu0 %570
    %v572 = vrot.slane %v571, 4
    %v573 = vadd.f32 %v571, %v572
    %v574 = vrot.slane %v573, 2
    %v575 = vadd.f32 %v573, %v574
    %v576 = vrot.slane %v575, 1
    %v577 = vadd.f32 %v575, %v576
    %s578 = vtos %v577
    %v579 = vsel %vm527, 1, 0
    %v580 = vsel %vm528, 1, 0
    %v581 = vsel %vm529, 1, 0
    %v582 = vsel %vm530, 1, 0
    %v583 = vsel %vm531, 1, 0
    %v584 = vsel %vm532, 1, 0
    %v585 = vsel %vm533, 1, 0
    %v586 = vsel %vm534, 1, 0
    %v587 = vsel %vm535, 1, 0
    %v588 = vsel %vm536, 1, 0
    %v589 = vcvt.s32.f32 %v579
    %v590 = vcvt.s32.f32 %v580
    %v591 = vcvt.s32.f32 %v581
    %v592 = vcvt.s32.f32 %v582
    %v593 = vcvt.s32.f32 %v583
    %v594 = vcvt.s32.f32 %v584
    %v595 = vcvt.s32.f32 %v585
    %v596 = vcvt.s32.f32 %v586
    %v597 = vcvt.s32.f32 %v587
    %v598 = vcvt.s32.f32 %v588
    %v599 = vsel %vm550, %v589, 0.0
    %v600 = vsel %vm550, %v590, 0.0
    %v601 = vadd.f32 %v599, %v600
    %v602 = vsel %vm550, %v591, 0.0
    %v603 = vadd.f32 %v601, %v602
    %v604 = vsel %vm550, %v592, 0.0
    %v605 = vadd.f32 %v603, %v604
    %v606 = vsel %vm550, %v593, 0.0
    %v607 = vadd.f32 %v605, %v606
    %v608 = vsel %vm550, %v594, 0.0
    %v609 = vadd.f32 %v607, %v608
    %v610 = vsel %vm550, %v595, 0.0
    %v611 = vadd.f32 %v609, %v610
    %v612 = vsel %vm550, %v596, 0.0
    %v613 = vadd.f32 %v611, %v612
    %v614 = vsel %vm550, %v597, 0.0
    %v615 = vadd.f32 %v613, %v614
    %v616 = vsel %vm550, %v598, 0.0
    %v617 = vadd.f32 %v615, %v616
    %618 = vadd.xlane.f32.xlu0 %v617
    %v619 = vpop.xlane.xlu0 %618
    %v620 = vrot.slane %v619, 4
    %v621 = vadd.f32 %v619, %v620
    %v622 = vrot.slane %v621, 2
    %v623 = vadd.f32 %v621, %v622
    %v624 = vrot.slane %v623, 1
    %v625 = vadd.f32 %v623, %v624
    %s626 = vtos %v625
    %s627 = ssub.f32 %s320, %s578
    %s628 = smul.f32 %s539, 500.0
    %s629 = smul.f32 %s628, %s626
    %s630 = sadd.f32 %s627, %s629
    %v631 = vstv %s539
    %v632 = vsel %vm527, %v631, 0.0
    %v633 = vsel %vm528, %v631, 0.0
    %v634 = vsel %vm529, %v631, 0.0
    %v635 = vsel %vm530, %v631, 0.0
    %v636 = vsel %vm531, %v631, 0.0
    %v637 = vsel %vm532, %v631, 0.0
    %v638 = vsel %vm533, %v631, 0.0
    %v639 = vsel %vm534, %v631, 0.0
    %v640 = vsel %vm535, %v631, 0.0
    %v641 = vsel %vm536, %v631, 0.0
    %s642 = sld [smem:[#allocation3 + $0xb]]
    %s643 = sld [smem:[#allocation3 + $0xc]]
    %v644 = vstv %s642
    %vm645 = vcmp.ge.s32.totalorder %v480, %v644
    %vm646 = vcmp.ge.s32.totalorder %v481, %v644
    %vm647 = vcmp.ge.s32.totalorder %v482, %v644
    %vm648 = vcmp.ge.s32.totalorder %v483, %v644
    %vm649 = vcmp.ge.s32.totalorder %v484, %v644
    %vm650 = vcmp.ge.s32.totalorder %v485, %v644
    %vm651 = vcmp.ge.s32.totalorder %v486, %v644
    %vm652 = vcmp.ge.s32.totalorder %v487, %v644
    %vm653 = vcmp.ge.s32.totalorder %v488, %v644
    %vm654 = vcmp.ge.s32.totalorder %v489, %v644
    %vm655 = vmand %vm505, %vm645
    %vm656 = vmand %vm505, %vm646
    %vm657 = vmand %vm505, %vm647
    %vm658 = vmand %vm505, %vm648
    %vm659 = vmand %vm505, %vm649
    %vm660 = vmand %vm505, %vm650
    %vm661 = vmand %vm505, %vm651
    %vm662 = vmand %vm505, %vm652
    %vm663 = vmand %vm505, %vm653
    %vm664 = vmand %vm505, %vm654
    %v665 = vstv %s643
    %vm666 = vcmp.lt.s32.totalorder %v480, %v665
    %vm667 = vcmp.lt.s32.totalorder %v481, %v665
    %vm668 = vcmp.lt.s32.totalorder %v482, %v665
    %vm669 = vcmp.lt.s32.totalorder %v483, %v665
    %vm670 = vcmp.lt.s32.totalorder %v484, %v665
    %vm671 = vcmp.lt.s32.totalorder %v485, %v665
    %vm672 = vcmp.lt.s32.totalorder %v486, %v665
    %vm673 = vcmp.lt.s32.totalorder %v487, %v665
    %vm674 = vcmp.lt.s32.totalorder %v488, %v665
    %vm675 = vcmp.lt.s32.totalorder %v489, %v665
    %vm676 = vmand %vm655, %vm666
    %vm677 = vmand %vm656, %vm667
    %vm678 = vmand %vm657, %vm668
    %vm679 = vmand %vm658, %vm669
    %vm680 = vmand %vm659, %vm670
    %vm681 = vmand %vm660, %vm671
    %vm682 = vmand %vm661, %vm672
    %vm683 = vmand %vm662, %vm673
    %vm684 = vmand %vm663, %vm674
    %vm685 = vmand %vm664, %vm675
    %v686 = vrcp.pop 40000.0
    %s687 = vtos %v686
    %s688 = smul.f32 %s630, %s687
    %v689 = vstv %s688
    %v690 = vsel %vm676, %v689, %v632
    %v691 = vsel %vm677, %v689, %v633
    %v692 = vsel %vm678, %v689, %v634
    %v693 = vsel %vm679, %v689, %v635
    %v694 = vsel %vm680, %v689, %v636
    %v695 = vsel %vm681, %v689, %v637
    %v696 = vsel %vm682, %v689, %v638
    %v697 = vsel %vm683, %v689, %v639
    %v698 = vsel %vm684, %v689, %v640
    %v699 = vsel %vm685, %v689, %v641
    %vm700 = vmor %vm527, %vm676
    %vm701 = vmor %vm528, %vm677
    %vm702 = vmor %vm529, %vm678
    %vm703 = vmor %vm530, %vm679
    %vm704 = vmor %vm531, %vm680
    %vm705 = vmor %vm532, %vm681
    %vm706 = vmor %vm533, %vm682
    %vm707 = vmor %vm534, %vm683
    %vm708 = vmor %vm535, %vm684
    %vm709 = vmor %vm536, %vm685
    %v710 = vsel %vm339, %v327, %v30
    %v711 = vsel %vm340, %v328, %v31
    %v712 = vsel %vm341, %v329, %v32
    %v713 = vsel %vm342, %v330, %v33
    %v714 = vsel %vm339, %v327, %v34
    %v715 = vsel %vm340, %v328, %v35
    %v716 = vsel %vm341, %v329, %v36
    %v717 = vsel %vm342, %v330, %v37
    %v718 = vsel %vm339, %v327, %v38
    %v719 = vsel %vm340, %v328, %v39
    %v720 = vsel %vm341, %v329, %v40
    %v721 = vsel %vm342, %v330, %v41
    %v722 = vsel %vm339, %v327, %v42
    %v723 = vsel %vm340, %v328, %v43
    %v724 = vsel %vm341, %v329, %v44
    %v725 = vsel %vm342, %v330, %v45
    %v726 = vsel %vm339, %v327, %v46
    %v727 = vsel %vm340, %v328, %v47
    %v728 = vsel %vm341, %v329, %v48
    %v729 = vsel %vm342, %v330, %v49
    %v730 = vsel %vm339, %v327, %v50
    %v731 = vsel %vm340, %v328, %v51
    %v732 = vsel %vm341, %v329, %v52
    %v733 = vsel %vm342, %v330, %v53
    %v734 = vsel %vm339, %v327, %v54
    %v735 = vsel %vm340, %v328, %v55
    %v736 = vsel %vm341, %v329, %v56
    %v737 = vsel %vm342, %v330, %v57
    %v738 = vsel %vm339, %v327, %v58
    %v739 = vsel %vm340, %v328, %v59
    %v740 = vsel %vm341, %v329, %v60
    %v741 = vsel %vm342, %v330, %v61
    %v742 = vsel %vm339, %v327, %v62
    %v743 = vsel %vm340, %v328, %v63
    %v744 = vsel %vm341, %v329, %v64
    %v745 = vsel %vm342, %v330, %v65
    %v746 = vsel %vm339, %v327, %v66
    %v747 = vsel %vm340, %v328, %v67
    %v748 = vsel %vm341, %v329, %v68
    %v749 = vsel %vm342, %v330, %v69
    %v750 = vsel %vm700, 1, 0
    %v751 = vsel %vm701, 1, 0
    %v752 = vsel %vm702, 1, 0
    %v753 = vsel %vm703, 1, 0
    %v754 = vsel %vm704, 1, 0
    %v755 = vsel %vm705, 1, 0
    %v756 = vsel %vm706, 1, 0
    %v757 = vsel %vm707, 1, 0
    %v758 = vsel %vm708, 1, 0
    %v759 = vsel %vm709, 1, 0
    %vm760 = vcmp.eq.s32.totalorder %v750, 1
    %vm761 = vcmp.eq.s32.totalorder %v751, 1
    %vm762 = vcmp.eq.s32.totalorder %v752, 1
    %vm763 = vcmp.eq.s32.totalorder %v753, 1
    %vm764 = vcmp.eq.s32.totalorder %v754, 1
    %vm765 = vcmp.eq.s32.totalorder %v755, 1
    %vm766 = vcmp.eq.s32.totalorder %v756, 1
    %vm767 = vcmp.eq.s32.totalorder %v757, 1
    %vm768 = vcmp.eq.s32.totalorder %v758, 1
    %vm769 = vcmp.eq.s32.totalorder %v759, 1
    %v770 = vsel %vm760, %v690, %v710
    %v771 = vsel %vm760, %v690, %v711
    %v772 = vsel %vm760, %v690, %v712
    %v773 = vsel %vm760, %v690, %v713
    %v774 = vsel %vm761, %v691, %v714
    %v775 = vsel %vm761, %v691, %v715
    %v776 = vsel %vm761, %v691, %v716
    %v777 = vsel %vm761, %v691, %v717
    %v778 = vsel %vm762, %v692, %v718
    %v779 = vsel %vm762, %v692, %v719
    %v780 = vsel %vm762, %v692, %v720
    %v781 = vsel %vm762, %v692, %v721
    %v782 = vsel %vm763, %v693, %v722
    %v783 = vsel %vm763, %v693, %v723
    %v784 = vsel %vm763, %v693, %v724
    %v785 = vsel %vm763, %v693, %v725
    %v786 = vsel %vm764, %v694, %v726
    %v787 = vsel %vm764, %v694, %v727
    %v788 = vsel %vm764, %v694, %v728
    %v789 = vsel %vm764, %v694, %v729
    %v790 = vsel %vm765, %v695, %v730
    %v791 = vsel %vm765, %v695, %v731
    %v792 = vsel %vm765, %v695, %v732
    %v793 = vsel %vm765, %v695, %v733
    %v794 = vsel %vm766, %v696, %v734
    %v795 = vsel %vm766, %v696, %v735
    %v796 = vsel %vm766, %v696, %v736
    %v797 = vsel %vm766, %v696, %v737
    %v798 = vsel %vm767, %v697, %v738
    %v799 = vsel %vm767, %v697, %v739
    %v800 = vsel %vm767, %v697, %v740
    %v801 = vsel %vm767, %v697, %v741
    %v802 = vsel %vm768, %v698, %v742
    %v803 = vsel %vm768, %v698, %v743
    %v804 = vsel %vm768, %v698, %v744
    %v805 = vsel %vm768, %v698, %v745
    %v806 = vsel %vm769, %v699, %v746
    %v807 = vsel %vm769, %v699, %v747
    %v808 = vsel %vm769, %v699, %v748
    %v809 = vsel %vm769, %v699, %v749
    %810 = vst [vmem:[#allocation7] sm:$0xff] %v770
    %811 = vst [vmem:[#allocation7 + $0x8] sm:$0xff] %v771
    %812 = vst [vmem:[#allocation7 + $0x10] sm:$0xff] %v772
    %813 = vst.msk [vmem:[#allocation7 + $0x18] sm:$0xff] %vm115, %v773
    %814 = vst [vmem:[#allocation7 + $0x20] sm:$0xff] %v774
    %815 = vst [vmem:[#allocation7 + $0x28] sm:$0xff] %v775
    %816 = vst [vmem:[#allocation7 + $0x30] sm:$0xff] %v776
    %817 = vst.msk [vmem:[#allocation7 + $0x38] sm:$0xff] %vm115, %v777
    %818 = vst [vmem:[#allocation7 + $0x40] sm:$0xff] %v778
    %819 = vst [vmem:[#allocation7 + $0x48] sm:$0xff] %v779
    %820 = vst [vmem:[#allocation7 + $0x50] sm:$0xff] %v780
    %821 = vst.msk [vmem:[#allocation7 + $0x58] sm:$0xff] %vm115, %v781
    %822 = vst [vmem:[#allocation7 + $0x60] sm:$0xff] %v782
    %823 = vst [vmem:[#allocation7 + $0x68] sm:$0xff] %v783
    %824 = vst [vmem:[#allocation7 + $0x70] sm:$0xff] %v784
    %825 = vst.msk [vmem:[#allocation7 + $0x78] sm:$0xff] %vm115, %v785
    %826 = vst [vmem:[#allocation7 + $0x80] sm:$0xff] %v786
    %827 = vst [vmem:[#allocation7 + $0x88] sm:$0xff] %v787
    %828 = vst [vmem:[#allocation7 + $0x90] sm:$0xff] %v788
    %829 = vst.msk [vmem:[#allocation7 + $0x98] sm:$0xff] %vm115, %v789
    %830 = vst [vmem:[#allocation7 + $0xa0] sm:$0xff] %v790
    %831 = vst [vmem:[#allocation7 + $0xa8] sm:$0xff] %v791
    %832 = vst [vmem:[#allocation7 + $0xb0] sm:$0xff] %v792
    %833 = vst.msk [vmem:[#allocation7 + $0xb8] sm:$0xff] %vm115, %v793
    %834 = vst [vmem:[#allocation7 + $0xc0] sm:$0xff] %v794
    %835 = vst [vmem:[#allocation7 + $0xc8] sm:$0xff] %v795
    %836 = vst [vmem:[#allocation7 + $0xd0] sm:$0xff] %v796
    %837 = vst.msk [vmem:[#allocation7 + $0xd8] sm:$0xff] %vm115, %v797
    %838 = vst [vmem:[#allocation7 + $0xe0] sm:$0xff] %v798
    %839 = vst [vmem:[#allocation7 + $0xe8] sm:$0xff] %v799
    %840 = vst [vmem:[#allocation7 + $0xf0] sm:$0xff] %v800
    %841 = vst.msk [vmem:[#allocation7 + $0xf8] sm:$0xff] %vm115, %v801
    %842 = vst [vmem:[#allocation7 + $0x100] sm:$0xff] %v802
    %843 = vst [vmem:[#allocation7 + $0x108] sm:$0xff] %v803
    %844 = vst [vmem:[#allocation7 + $0x110] sm:$0xff] %v804
    %845 = vst.msk [vmem:[#allocation7 + $0x118] sm:$0xff] %vm115, %v805
    %846 = vst [vmem:[#allocation7 + $0x120] sm:$0xff] %v806
    %847 = vst [vmem:[#allocation7 + $0x128] sm:$0xff] %v807
    %848 = vst [vmem:[#allocation7 + $0x130] sm:$0xff] %v808
    %849 = vst.msk [vmem:[#allocation7 + $0x138] sm:$0xff] %vm115, %v809
    // Predicated region
    $region10: #{specaug_pallas.1} parent=1 // pred_check
      _
    $region11: #{specaug_pallas.1} parent=1 // pred_check_branch
      %851 = sbr.rel (0) target = $region13
    $region12: #{specaug_pallas.1} parent=1 // pred_region
      %s853 = ssub.s32 5120, 5120
      %854 = vsyncadd [#allocation6], %s853
      %s855 = sshll.u32 [#allocation7], 4
      %s856 = int_to_ptr.vmem [resolvable:$true] %s855
      %861 = dma.vmem_to_hbm [thread:$0]  %s856, 5120, %s2, [#allocation6], 512, 512, 32
    $region13: #{specaug_pallas.1} parent=1 // pred_fallthru
      _
    // Predicated region
    $region14: #{specaug_pallas.1} parent=1 // pred_check
      _
    $region15: #{specaug_pallas.1} parent=1 // pred_check_branch
      %863 = sbr.rel (0) target = $region17
    $region16: #{specaug_pallas.1} parent=1 // pred_region
      %864 = dma.done [#allocation6], 5120
    $region17: #{specaug_pallas.1} parent=1 // pred_fallthru
      _
    %865 = vsyncpa [#allocation5], 1
    %866 = vsyncpa [#allocation6], 1

</llo_original>
